<compile_context>
chip_gen: v7x
topology: tpu7x:2x2x1
jax: 0.10.0
libtpu: 0.0.40
codegen_flags: <defaults>
</compile_context>

<pallas_src>
import jax
import jax.numpy as jnp
from jax.experimental import pallas as pl
from jax.experimental.pallas import tpu as pltpu


def _make_fusion_kernel(n: int):
    def kernel(x_ref, w_ref, o_ref):
        # x_ref: (n, Tt, B, D)  branch outputs for this time block (native layout)
        # w_ref: (n, Tt, 1, 1)  pre-normalized fusion weights (f32)
        # o_ref: (Tt, B, D)     fused output for this time block
        acc = x_ref[0].astype(jnp.float32) * w_ref[0]
        for k in range(1, n):  # n is tiny & static -> unrolled, stays on the VPU
            acc = acc + x_ref[k].astype(jnp.float32) * w_ref[k]
        o_ref[...] = acc.astype(o_ref.dtype)

    return kernel


def fusion_module_forward(out_res_stack, weight, is_norm=True, t_block=None):
    """out_res_stack: (n, t_pred, B, D), so out_res_stack[k][i] matches the
    torch module's out_res_lst[k][i].  weight: (t_pred, n).
    Returns (t_pred, B, D) f32 fused predictions."""
    n, t_pred, B, D = out_res_stack.shape

    # Tiny scalar-table preprocessing (t_pred * n floats -- negligible):
    # fold the normalization into the weights so the kernel only does FMAs.
    w = weight.astype(jnp.float32)
    if is_norm:
        w = w / jnp.sum(w, axis=-1, keepdims=True)
    # (t_pred, n) -> (n, t_pred, 1, 1): lets the kernel broadcast each
    # per-(branch, time) scalar across its (B, D) slab.
    w4 = jnp.transpose(w, (1, 0)).reshape(n, t_pred, 1, 1)

    # Time-block size: whole problem in one invocation when it fits comfortably
    # in VMEM (amortizes per-grid-step overhead); otherwise chunk the time axis.
    # Budget ~8 MiB per block so double-buffered in+out stays well under the
    # default scoped VMEM on all of v5e/v6e/v7x.
    if t_block is None:
        bytes_per_step = (n + 1) * B * D * 4  # input block + output block, f32
        budget = 8 << 20
        t_block = int(max(1, min(t_pred, budget // max(1, bytes_per_step))))
    grid = (pl.cdiv(t_pred, t_block),)

    out = pl.pallas_call(
        _make_fusion_kernel(n),
        out_shape=jax.ShapeDtypeStruct((t_pred, B, D), jnp.float32),
        grid=grid,
        in_specs=[
            # Read the native (n, t_pred, B, D) layout directly: branch axis
            # whole, time blocked, (B, D) kept at full extent (so the (8,128)
            # tiling constraint is trivially satisfied) -- no wrapper reshape.
            pl.BlockSpec((n, t_block, B, D), lambda i: (0, i, 0, 0)),
            pl.BlockSpec((n, t_block, 1, 1), lambda i: (0, i, 0, 0)),
        ],
        out_specs=pl.BlockSpec((t_block, B, D), lambda i: (i, 0, 0)),
        compiler_params=pltpu.CompilerParams(
            dimension_semantics=("arbitrary",),
        ),
    )(out_res_stack, w4)

    return out


def fusion_reference(out_res_stack, weight, is_norm=True):
    # Pure-JAX reference mirroring the PyTorch loops exactly.
    n, t_pred, B, D = out_res_stack.shape
    outs = []
    for i in range(t_pred):
        s = jnp.zeros((B, D), jnp.float32)
        w = 0.0
        for k in range(n):
            s = s + out_res_stack[k, i] * weight[i, k]
            w = w + weight[i, k]
        outs.append(s / w if is_norm else s)
    return jnp.stack(outs, axis=0)


if __name__ == "__main__":
    # Module hyper-params (small, consistent with the module's usage).
    joint_num = 4
    t_pred = 8
    t_pred_lst = [2, 4, 8]
    n = len(t_pred_lst)
    is_norm = True

    batch = 2
    feat = joint_num * 3  # per-frame pose vector

    key = jax.random.PRNGKey(0)
    k_x, k_w = jax.random.split(key)

    # out_res_lst[k][i] -> stacked tensor (n, t_pred, batch, feat)
    out_res_stack = jax.random.normal(k_x, (n, t_pred, batch, feat), jnp.float32)

    # Parameter init: module uses 1/n everywhere; add a small deterministic
    # perturbation so the weighted-sum / normalization path is non-trivial.
    weight = jnp.full((t_pred, n), 1.0 / n, jnp.float32) \
        + 0.05 * jax.random.normal(k_w, (t_pred, n), jnp.float32)

    out = fusion_module_forward(out_res_stack, weight, is_norm=is_norm)
    out = jax.block_until_ready(out)

    ref = fusion_reference(out_res_stack, weight, is_norm=is_norm)

    assert out.shape == (t_pred, batch, feat), out.shape
    assert jnp.allclose(out, ref, atol=1e-5, rtol=1e-5), \
        f"max abs err = {jnp.max(jnp.abs(out - ref))}"

    print("KERNEL_OK")
</pallas_src>

<mosaic_0001>
module attributes {stable_mosaic.version = 11 : i64} {
  func.func @kernel(%arg0: i32, %arg1: memref<3x8x2x12xf32, #tpu.memory_space<vmem>>, %arg2: memref<3x8x1x1xf32, #tpu.memory_space<vmem>>, %arg3: memref<8x2x12xf32, #tpu.memory_space<vmem>>) attributes {dimension_semantics = [#tpu.dimension_semantics<arbitrary>], iteration_bounds = array<i64: 1>, scalar_prefetch = 0 : i64, scratch_operands = 0 : i64, tpu.core_type = #tpu.core_type<tc>, window_params = [{transform_indices = @transform_0, window_bounds = array<i64: 3, 8, 2, 12>}, {transform_indices = @transform_1, window_bounds = array<i64: 3, 8, 1, 1>}, {transform_indices = @transform_2, window_bounds = array<i64: 8, 2, 12>}]} {
    %c0 = arith.constant 0 : index
    %c0_0 = arith.constant 0 : index
    %c0_1 = arith.constant 0 : index
    %c0_2 = arith.constant 0 : index
    %0 = vector.load %arg1[%c0, %c0_0, %c0_1, %c0_2] : memref<3x8x2x12xf32, #tpu.memory_space<vmem>>, vector<1x8x2x12xf32>
    %1 = vector.shape_cast %0 : vector<1x8x2x12xf32> to vector<8x2x12xf32>
    %c0_3 = arith.constant 0 : index
    %c0_4 = arith.constant 0 : index
    %c0_5 = arith.constant 0 : index
    %c0_6 = arith.constant 0 : index
    %2 = vector.load %arg2[%c0_3, %c0_4, %c0_5, %c0_6] : memref<3x8x1x1xf32, #tpu.memory_space<vmem>>, vector<1x8x1x1xf32>
    %3 = vector.shape_cast %2 : vector<1x8x1x1xf32> to vector<8x1x1xf32>
    %4 = vector.broadcast %3 : vector<8x1x1xf32> to vector<8x2x12xf32>
    %5 = arith.mulf %1, %4 : vector<8x2x12xf32>
    %c1 = arith.constant 1 : index
    %c0_7 = arith.constant 0 : index
    %c0_8 = arith.constant 0 : index
    %c0_9 = arith.constant 0 : index
    %6 = vector.load %arg1[%c1, %c0_7, %c0_8, %c0_9] : memref<3x8x2x12xf32, #tpu.memory_space<vmem>>, vector<1x8x2x12xf32>
    %7 = vector.shape_cast %6 : vector<1x8x2x12xf32> to vector<8x2x12xf32>
    %c1_10 = arith.constant 1 : index
    %c0_11 = arith.constant 0 : index
    %c0_12 = arith.constant 0 : index
    %c0_13 = arith.constant 0 : index
    %8 = vector.load %arg2[%c1_10, %c0_11, %c0_12, %c0_13] : memref<3x8x1x1xf32, #tpu.memory_space<vmem>>, vector<1x8x1x1xf32>
    %9 = vector.shape_cast %8 : vector<1x8x1x1xf32> to vector<8x1x1xf32>
    %10 = vector.broadcast %9 : vector<8x1x1xf32> to vector<8x2x12xf32>
    %11 = arith.mulf %7, %10 : vector<8x2x12xf32>
    %12 = arith.addf %5, %11 : vector<8x2x12xf32>
    %c2 = arith.constant 2 : index
    %c0_14 = arith.constant 0 : index
    %c0_15 = arith.constant 0 : index
    %c0_16 = arith.constant 0 : index
    %13 = vector.load %arg1[%c2, %c0_14, %c0_15, %c0_16] : memref<3x8x2x12xf32, #tpu.memory_space<vmem>>, vector<1x8x2x12xf32>
    %14 = vector.shape_cast %13 : vector<1x8x2x12xf32> to vector<8x2x12xf32>
    %c2_17 = arith.constant 2 : index
    %c0_18 = arith.constant 0 : index
    %c0_19 = arith.constant 0 : index
    %c0_20 = arith.constant 0 : index
    %15 = vector.load %arg2[%c2_17, %c0_18, %c0_19, %c0_20] : memref<3x8x1x1xf32, #tpu.memory_space<vmem>>, vector<1x8x1x1xf32>
    %16 = vector.shape_cast %15 : vector<1x8x1x1xf32> to vector<8x1x1xf32>
    %17 = vector.broadcast %16 : vector<8x1x1xf32> to vector<8x2x12xf32>
    %18 = arith.mulf %14, %17 : vector<8x2x12xf32>
    %19 = arith.addf %12, %18 : vector<8x2x12xf32>
    %c0_21 = arith.constant 0 : index
    %c0_22 = arith.constant 0 : index
    %c0_23 = arith.constant 0 : index
    %20 = vector.load %arg3[%c0_21, %c0_22, %c0_23] : memref<8x2x12xf32, #tpu.memory_space<vmem>>, vector<8x2x12xf32>
    tpu.vector_store %arg3[%c0_21, %c0_22, %c0_23], %19 {strides = array<i32>} : memref<8x2x12xf32, #tpu.memory_space<vmem>>, vector<8x2x12xf32>,
    return
  }
  func.func @transform_0(%arg0: i32) -> (i32, i32, i32, i32) {
    %c0_i32 = arith.constant 0 : i32
    %c0_i32_0 = arith.constant 0 : i32
    %c0_i32_1 = arith.constant 0 : i32
    %c0_i32_2 = arith.constant 0 : i32
    return %c0_i32, %arg0, %c0_i32_0, %c0_i32_1 : i32, i32, i32, i32
  }
  func.func @transform_1(%arg0: i32) -> (i32, i32, i32, i32) {
    %c0_i32 = arith.constant 0 : i32
    %c0_i32_0 = arith.constant 0 : i32
    %c0_i32_1 = arith.constant 0 : i32
    %c0_i32_2 = arith.constant 0 : i32
    return %c0_i32, %arg0, %c0_i32_0, %c0_i32_1 : i32, i32, i32, i32
  }
  func.func @transform_2(%arg0: i32) -> (i32, i32, i32) {
    %c0_i32 = arith.constant 0 : i32
    %c0_i32_0 = arith.constant 0 : i32
    %c0_i32_1 = arith.constant 0 : i32
    return %arg0, %c0_i32, %c0_i32_0 : i32, i32, i32
  }
}

</mosaic_0001>

<llo_original>
// kernel: tpu_custom_call.1
$region0: #{tpu_custom_call.1}
  #allocation0 [shape = 'u32[]', space=smem, size = 0x4, offset = 0x4, fixed_abs, tag = 'smem constant byte address 0x4 - core index']
  #allocation1 [shape = 'u32[144,128]{1,0:T(1,128)}', space=vmem, size = 0x12000, scoped, tag = 'internal scratch']
  %s0 = inlined_call_operand.hbm [shape: f32[3,8,2,12], index: 0, kind: input, shape index: {}]
  %s1 = inlined_call_operand.vmem [shape: f32[3,8,1,1], index: 1, kind: input, shape index: {}]
  %s2 = inlined_call_operand.hbm [shape: f32[8,2,12], index: 2, kind: output, shape index: {}]
  %s3 = sld [smem:[#allocation0]]
  $region22: #{tpu_custom_call.1} parent=0
    _
  %s5 = ssub.s32 1, %s3
  %s6 = scalar_select 0, %s5, %s3
  $region1: #{tpu_custom_call.1} parent=0
    #allocation2 [shape = 'u8[24576]{0}', space=vmem, size = 0x6000, scoped, tag = 'input window, operand 0, single buffered']
    #allocation3 [shape = 's32[1]{0}', space=sflag, size = 0x4, scoped, tag = 'scoped memory for tpu_custom_call.1']
    #allocation4 [shape = 's32[1]{0}', space=sflag, size = 0x4, scoped, tag = 'scoped memory for tpu_custom_call.1']
    #allocation5 [shape = 'u8[8192]{0}', space=vmem, size = 0x2000, scoped, tag = 'output window, operand 0, single buffered']
    %7 = vsyncpa [#allocation3], 0
    %8 = vsyncpa [#allocation4], 0
    // Predicated region
    $region2: #{tpu_custom_call.1} parent=1 // pred_check
      _
    $region3: #{tpu_custom_call.1} parent=1 // pred_check_branch
      %10 = sbr.rel (0) target = $region5
    $region4: #{tpu_custom_call.1} parent=1 // pred_region
      %s12 = ssub.s32 768, 768
      %13 = vsyncadd [#allocation3], %s12
      %s14 = sshll.u32 [#allocation2], 4
      %s15 = int_to_ptr.vmem [resolvable:$true] %s14
      %20 = dma.hbm_to_vmem [thread:$0]  %s0, 768, %s15, [#allocation3], 32, 32, 2
    $region5: #{tpu_custom_call.1} parent=1 // pred_fallthru
      _
    // Predicated region
    $region6: #{tpu_custom_call.1} parent=1 // pred_check
      _
    $region7: #{tpu_custom_call.1} parent=1 // pred_check_branch
      %22 = sbr.rel (0) target = $region9
    $region8: #{tpu_custom_call.1} parent=1 // pred_region
      _
    $region9: #{tpu_custom_call.1} parent=1 // pred_fallthru
      _
    // Predicated region
    $region10: #{tpu_custom_call.1} parent=1 // pred_check
      _
    $region11: #{tpu_custom_call.1} parent=1 // pred_check_branch
      %24 = sbr.rel (0) target = $region13
    $region12: #{tpu_custom_call.1} parent=1 // pred_region
      %25 = dma.done [#allocation3], 768
    $region13: #{tpu_custom_call.1} parent=1 // pred_fallthru
      _
    %v26 = vld [vmem:[#allocation2] sm:$0x3]
    %v27 = vld [vmem:[#allocation2 + $0x2] sm:$0x3]
    %v28 = vld [vmem:[#allocation2 + $0x4] sm:$0x3]
    %v29 = vld [vmem:[#allocation2 + $0x6] sm:$0x3]
    %v30 = vld [vmem:[#allocation2 + $0x8] sm:$0x3]
    %v31 = vld [vmem:[#allocation2 + $0xa] sm:$0x3]
    %v32 = vld [vmem:[#allocation2 + $0xc] sm:$0x3]
    %v33 = vld [vmem:[#allocation2 + $0xe] sm:$0x3]
    %v34 = vld [vmem:[%s1] sm:$0x1]
    %v35 = vld [vmem:[%s1 + $0x1] sm:$0x1]
    %v36 = vld [vmem:[%s1 + $0x2] sm:$0x1]
    %v37 = vld [vmem:[%s1 + $0x3] sm:$0x1]
    %v38 = vld [vmem:[%s1 + $0x4] sm:$0x1]
    %v39 = vld [vmem:[%s1 + $0x5] sm:$0x1]
    %v40 = vld [vmem:[%s1 + $0x6] sm:$0x1]
    %v41 = vld [vmem:[%s1 + $0x7] sm:$0x1]
    %v50 = vlaneseq
    %v51 = vshrl.u32 %v50, 7
    %v52 = vsub.s32 0, %v51
    %v53 = vrot.slane %v34, %v52
    %v54 = vlaneseq
    %v55 = vshrl.u32 %v54, 7
    %v56 = vsub.s32 0, %v55
    %v57 = vrot.slane %v35, %v56
    %v58 = vlaneseq
    %v59 = vshrl.u32 %v58, 7
    %v60 = vsub.s32 0, %v59
    %v61 = vrot.slane %v36, %v60
    %v62 = vlaneseq
    %v63 = vshrl.u32 %v62, 7
    %v64 = vsub.s32 0, %v63
    %v65 = vrot.slane %v37, %v64
    %v66 = vlaneseq
    %v67 = vshrl.u32 %v66, 7
    %v68 = vsub.s32 0, %v67
    %v69 = vrot.slane %v38, %v68
    %v70 = vlaneseq
    %v71 = vshrl.u32 %v70, 7
    %v72 = vsub.s32 0, %v71
    %v73 = vrot.slane %v39, %v72
    %v74 = vlaneseq
    %v75 = vshrl.u32 %v74, 7
    %v76 = vsub.s32 0, %v75
    %v77 = vrot.slane %v40, %v76
    %v78 = vlaneseq
    %v79 = vshrl.u32 %v78, 7
    %v80 = vsub.s32 0, %v79
    %v81 = vrot.slane %v41, %v80
    %82 = vset.pattern.permute.xlu0 0
    %83 = vperm.xlu0 %82, %v53
    %v84 = vpop.permute.xlu0 %83
    %86 = vset.pattern.permute.xlu0 0
    %87 = vperm.xlu0 %86, %v57
    %v88 = vpop.permute.xlu0 %87
    %90 = vset.pattern.permute.xlu0 0
    %91 = vperm.xlu0 %90, %v61
    %v92 = vpop.permute.xlu0 %91
    %94 = vset.pattern.permute.xlu0 0
    %95 = vperm.xlu0 %94, %v65
    %v96 = vpop.permute.xlu0 %95
    %98 = vset.pattern.permute.xlu0 0
    %99 = vperm.xlu0 %98, %v69
    %v100 = vpop.permute.xlu0 %99
    %102 = vset.pattern.permute.xlu0 0
    %103 = vperm.xlu0 %102, %v73
    %v104 = vpop.permute.xlu0 %103
    %106 = vset.pattern.permute.xlu0 0
    %107 = vperm.xlu0 %106, %v77
    %v108 = vpop.permute.xlu0 %107
    %110 = vset.pattern.permute.xlu0 0
    %111 = vperm.xlu0 %110, %v81
    %v112 = vpop.permute.xlu0 %111
    %v114 = vmul.f32 %v26, %v84
    %v115 = vmul.f32 %v27, %v88
    %v116 = vmul.f32 %v28, %v92
    %v117 = vmul.f32 %v29, %v96
    %v118 = vmul.f32 %v30, %v100
    %v119 = vmul.f32 %v31, %v104
    %v120 = vmul.f32 %v32, %v108
    %v121 = vmul.f32 %v33, %v112
    %s122 = scalar_lea.vmem [#allocation2], 16
    %v123 = vld [vmem:[%s122] sm:$0x3]
    %v124 = vld [vmem:[%s122 + $0x2] sm:$0x3]
    %v125 = vld [vmem:[%s122 + $0x4] sm:$0x3]
    %v126 = vld [vmem:[%s122 + $0x6] sm:$0x3]
    %v127 = vld [vmem:[%s122 + $0x8] sm:$0x3]
    %v128 = vld [vmem:[%s122 + $0xa] sm:$0x3]
    %v129 = vld [vmem:[%s122 + $0xc] sm:$0x3]
    %v130 = vld [vmem:[%s122 + $0xe] sm:$0x3]
    %s131 = scalar_lea.vmem %s1, 8
    %v132 = vld [vmem:[%s131] sm:$0x1]
    %v133 = vld [vmem:[%s131 + $0x1] sm:$0x1]
    %v134 = vld [vmem:[%s131 + $0x2] sm:$0x1]
    %v135 = vld [vmem:[%s131 + $0x3] sm:$0x1]
    %v136 = vld [vmem:[%s131 + $0x4] sm:$0x1]
    %v137 = vld [vmem:[%s131 + $0x5] sm:$0x1]
    %v138 = vld [vmem:[%s131 + $0x6] sm:$0x1]
    %v139 = vld [vmem:[%s131 + $0x7] sm:$0x1]
    %v148 = vlaneseq
    %v149 = vshrl.u32 %v148, 7
    %v150 = vsub.s32 0, %v149
    %v151 = vrot.slane %v132, %v150
    %v152 = vlaneseq
    %v153 = vshrl.u32 %v152, 7
    %v154 = vsub.s32 0, %v153
    %v155 = vrot.slane %v133, %v154
    %v156 = vlaneseq
    %v157 = vshrl.u32 %v156, 7
    %v158 = vsub.s32 0, %v157
    %v159 = vrot.slane %v134, %v158
    %v160 = vlaneseq
    %v161 = vshrl.u32 %v160, 7
    %v162 = vsub.s32 0, %v161
    %v163 = vrot.slane %v135, %v162
    %v164 = vlaneseq
    %v165 = vshrl.u32 %v164, 7
    %v166 = vsub.s32 0, %v165
    %v167 = vrot.slane %v136, %v166
    %v168 = vlaneseq
    %v169 = vshrl.u32 %v168, 7
    %v170 = vsub.s32 0, %v169
    %v171 = vrot.slane %v137, %v170
    %v172 = vlaneseq
    %v173 = vshrl.u32 %v172, 7
    %v174 = vsub.s32 0, %v173
    %v175 = vrot.slane %v138, %v174
    %v176 = vlaneseq
    %v177 = vshrl.u32 %v176, 7
    %v178 = vsub.s32 0, %v177
    %v179 = vrot.slane %v139, %v178
    %180 = vset.pattern.permute.xlu0 0
    %181 = vperm.xlu0 %180, %v151
    %v182 = vpop.permute.xlu0 %181
    %184 = vset.pattern.permute.xlu0 0
    %185 = vperm.xlu0 %184, %v155
    %v186 = vpop.permute.xlu0 %185
    %188 = vset.pattern.permute.xlu0 0
    %189 = vperm.xlu0 %188, %v159
    %v190 = vpop.permute.xlu0 %189
    %192 = vset.pattern.permute.xlu0 0
    %193 = vperm.xlu0 %192, %v163
    %v194 = vpop.permute.xlu0 %193
    %196 = vset.pattern.permute.xlu0 0
    %197 = vperm.xlu0 %196, %v167
    %v198 = vpop.permute.xlu0 %197
    %200 = vset.pattern.permute.xlu0 0
    %201 = vperm.xlu0 %200, %v171
    %v202 = vpop.permute.xlu0 %201
    %204 = vset.pattern.permute.xlu0 0
    %205 = vperm.xlu0 %204, %v175
    %v206 = vpop.permute.xlu0 %205
    %208 = vset.pattern.permute.xlu0 0
    %209 = vperm.xlu0 %208, %v179
    %v210 = vpop.permute.xlu0 %209
    %v212 = vmul.f32 %v123, %v182
    %v213 = vmul.f32 %v124, %v186
    %v214 = vmul.f32 %v125, %v190
    %v215 = vmul.f32 %v126, %v194
    %v216 = vmul.f32 %v127, %v198
    %v217 = vmul.f32 %v128, %v202
    %v218 = vmul.f32 %v129, %v206
    %v219 = vmul.f32 %v130, %v210
    %v220 = vadd.f32 %v114, %v212
    %v221 = vadd.f32 %v115, %v213
    %v222 = vadd.f32 %v116, %v214
    %v223 = vadd.f32 %v117, %v215
    %v224 = vadd.f32 %v118, %v216
    %v225 = vadd.f32 %v119, %v217
    %v226 = vadd.f32 %v120, %v218
    %v227 = vadd.f32 %v121, %v219
    %s228 = scalar_lea.vmem [#allocation2], 32
    %v229 = vld [vmem:[%s228] sm:$0x3]
    %v230 = vld [vmem:[%s228 + $0x2] sm:$0x3]
    %v231 = vld [vmem:[%s228 + $0x4] sm:$0x3]
    %v232 = vld [vmem:[%s228 + $0x6] sm:$0x3]
    %v233 = vld [vmem:[%s228 + $0x8] sm:$0x3]
    %v234 = vld [vmem:[%s228 + $0xa] sm:$0x3]
    %v235 = vld [vmem:[%s228 + $0xc] sm:$0x3]
    %v236 = vld [vmem:[%s228 + $0xe] sm:$0x3]
    %s237 = scalar_lea.vmem %s1, 16
    %v238 = vld [vmem:[%s237] sm:$0x1]
    %v239 = vld [vmem:[%s237 + $0x1] sm:$0x1]
    %v240 = vld [vmem:[%s237 + $0x2] sm:$0x1]
    %v241 = vld [vmem:[%s237 + $0x3] sm:$0x1]
    %v242 = vld [vmem:[%s237 + $0x4] sm:$0x1]
    %v243 = vld [vmem:[%s237 + $0x5] sm:$0x1]
    %v244 = vld [vmem:[%s237 + $0x6] sm:$0x1]
    %v245 = vld [vmem:[%s237 + $0x7] sm:$0x1]
    %v254 = vlaneseq
    %v255 = vshrl.u32 %v254, 7
    %v256 = vsub.s32 0, %v255
    %v257 = vrot.slane %v238, %v256
    %v258 = vlaneseq
    %v259 = vshrl.u32 %v258, 7
    %v260 = vsub.s32 0, %v259
    %v261 = vrot.slane %v239, %v260
    %v262 = vlaneseq
    %v263 = vshrl.u32 %v262, 7
    %v264 = vsub.s32 0, %v263
    %v265 = vrot.slane %v240, %v264
    %v266 = vlaneseq
    %v267 = vshrl.u32 %v266, 7
    %v268 = vsub.s32 0, %v267
    %v269 = vrot.slane %v241, %v268
    %v270 = vlaneseq
    %v271 = vshrl.u32 %v270, 7
    %v272 = vsub.s32 0, %v271
    %v273 = vrot.slane %v242, %v272
    %v274 = vlaneseq
    %v275 = vshrl.u32 %v274, 7
    %v276 = vsub.s32 0, %v275
    %v277 = vrot.slane %v243, %v276
    %v278 = vlaneseq
    %v279 = vshrl.u32 %v278, 7
    %v280 = vsub.s32 0, %v279
    %v281 = vrot.slane %v244, %v280
    %v282 = vlaneseq
    %v283 = vshrl.u32 %v282, 7
    %v284 = vsub.s32 0, %v283
    %v285 = vrot.slane %v245, %v284
    %286 = vset.pattern.permute.xlu0 0
    %287 = vperm.xlu0 %286, %v257
    %v288 = vpop.permute.xlu0 %287
    %290 = vset.pattern.permute.xlu0 0
    %291 = vperm.xlu0 %290, %v261
    %v292 = vpop.permute.xlu0 %291
    %294 = vset.pattern.permute.xlu0 0
    %295 = vperm.xlu0 %294, %v265
    %v296 = vpop.permute.xlu0 %295
    %298 = vset.pattern.permute.xlu0 0
    %299 = vperm.xlu0 %298, %v269
    %v300 = vpop.permute.xlu0 %299
    %302 = vset.pattern.permute.xlu0 0
    %303 = vperm.xlu0 %302, %v273
    %v304 = vpop.permute.xlu0 %303
    %306 = vset.pattern.permute.xlu0 0
    %307 = vperm.xlu0 %306, %v277
    %v308 = vpop.permute.xlu0 %307
    %310 = vset.pattern.permute.xlu0 0
    %311 = vperm.xlu0 %310, %v281
    %v312 = vpop.permute.xlu0 %311
    %314 = vset.pattern.permute.xlu0 0
    %315 = vperm.xlu0 %314, %v285
    %v316 = vpop.permute.xlu0 %315
    %v318 = vmul.f32 %v229, %v288
    %v319 = vmul.f32 %v230, %v292
    %v320 = vmul.f32 %v231, %v296
    %v321 = vmul.f32 %v232, %v300
    %v322 = vmul.f32 %v233, %v304
    %v323 = vmul.f32 %v234, %v308
    %v324 = vmul.f32 %v235, %v312
    %v325 = vmul.f32 %v236, %v316
    %v326 = vadd.f32 %v220, %v318
    %v327 = vadd.f32 %v221, %v319
    %v328 = vadd.f32 %v222, %v320
    %v329 = vadd.f32 %v223, %v321
    %v330 = vadd.f32 %v224, %v322
    %v331 = vadd.f32 %v225, %v323
    %v332 = vadd.f32 %v226, %v324
    %v333 = vadd.f32 %v227, %v325
    %vm334 = vcmask 91136
    %335 = vst.msk [vmem:[#allocation5] sm:$0x3] %vm334, %v326
    %336 = vst.msk [vmem:[#allocation5 + $0x2] sm:$0x3] %vm334, %v327
    %337 = vst.msk [vmem:[#allocation5 + $0x4] sm:$0x3] %vm334, %v328
    %338 = vst.msk [vmem:[#allocation5 + $0x6] sm:$0x3] %vm334, %v329
    %339 = vst.msk [vmem:[#allocation5 + $0x8] sm:$0x3] %vm334, %v330
    %340 = vst.msk [vmem:[#allocation5 + $0xa] sm:$0x3] %vm334, %v331
    %341 = vst.msk [vmem:[#allocation5 + $0xc] sm:$0x3] %vm334, %v332
    %342 = vst.msk [vmem:[#allocation5 + $0xe] sm:$0x3] %vm334, %v333
    // Predicated region
    $region14: #{tpu_custom_call.1} parent=1 // pred_check
      _
    $region15: #{tpu_custom_call.1} parent=1 // pred_check_branch
      %344 = sbr.rel (0) target = $region17
    $region16: #{tpu_custom_call.1} parent=1 // pred_region
      %s346 = ssub.s32 256, 256
      %347 = vsyncadd [#allocation4], %s346
      %s348 = sshll.u32 [#allocation5], 4
      %s349 = int_to_ptr.vmem [resolvable:$true] %s348
      %354 = dma.vmem_to_hbm [thread:$0]  %s349, 256, %s2, [#allocation4], 32, 32, 2
    $region17: #{tpu_custom_call.1} parent=1 // pred_fallthru
      _
    // Predicated region
    $region18: #{tpu_custom_call.1} parent=1 // pred_check
      _
    $region19: #{tpu_custom_call.1} parent=1 // pred_check_branch
      %356 = sbr.rel (0) target = $region21
    $region20: #{tpu_custom_call.1} parent=1 // pred_region
      %357 = dma.done [#allocation4], 256
    $region21: #{tpu_custom_call.1} parent=1 // pred_fallthru
      _
    %358 = vsyncpa [#allocation3], 1
    %359 = vsyncpa [#allocation4], 1

</llo_original>
